<compile_context>
chip_gen: v7x
topology: tpu7x:2x2x1
jax: 0.10.0
libtpu: 0.0.40
codegen_flags: <defaults>
</compile_context>

<pallas_src>
import functools

import jax
import jax.numpy as jnp
from jax.experimental import pallas as pl
from jax.experimental.pallas import tpu as pltpu


def _mlp_l2norm_kernel(x_ref, w1_ref, b1_ref, w2_ref, b2_ref, o_ref, *, eps):
    # x_ref : (TM, Cin)      one tile of sampled patches
    # w1_ref: (Cin, NC), b1_ref: (1, NC)   first Linear
    # w2_ref: (NC, NC),  b2_ref: (1, NC)   second Linear
    # o_ref : (TM, NC)
    h = jnp.dot(x_ref[...], w1_ref[...], preferred_element_type=jnp.float32)
    h = jnp.maximum(h + b1_ref[...], 0.0)                      # Linear + ReLU
    y = jnp.dot(h, w2_ref[...], preferred_element_type=jnp.float32)
    y = y + b2_ref[...]                                        # second Linear
    # Normalize(2): x / (||x||_2 + 1e-7), norm over the channel (last) dim.
    norm = jnp.sqrt(jnp.sum(y * y, axis=-1, keepdims=True))
    inv = pl.reciprocal(norm + eps, approx=False)              # EUP, not VALU
    o_ref[...] = (y * inv).astype(o_ref.dtype)


def mlp_l2norm(x, w1, b1, w2, b2, *, eps=1e-7, tile_m=512):
    """x: (M, Cin); w1: (Cin, NC); b1, b2: (NC,); w2: (NC, NC) -> (M, NC)."""
    M, Cin = x.shape
    NC = w1.shape[1]
    assert NC % 128 == 0, "nc should be a multiple of 128 for lane-dense output"

    # Pick a row tile: large for real workloads (hides DMA behind the two
    # matmuls), a single sublane-aligned tile for tiny inputs.  Rows are
    # processed independently, so padded rows are just junk that we slice off
    # at the end (no stats corruption possible).
    if M < tile_m:
        tile_m = pl.cdiv(M, 8) * 8
    M_pad = pl.cdiv(M, tile_m) * tile_m
    if M_pad != M:
        x = jnp.pad(x, ((0, M_pad - M), (0, 0)))

    out = pl.pallas_call(
        functools.partial(_mlp_l2norm_kernel, eps=eps),
        out_shape=jax.ShapeDtypeStruct((M_pad, NC), jnp.float32),
        grid=(M_pad // tile_m,),
        in_specs=[
            pl.BlockSpec((tile_m, Cin), lambda i: (i, 0)),  # streamed row tiles
            pl.BlockSpec((Cin, NC), lambda i: (0, 0)),      # weights stay resident
            pl.BlockSpec((1, NC), lambda i: (0, 0)),
            pl.BlockSpec((NC, NC), lambda i: (0, 0)),
            pl.BlockSpec((1, NC), lambda i: (0, 0)),
        ],
        out_specs=pl.BlockSpec((tile_m, NC), lambda i: (i, 0)),
        compiler_params=pltpu.CompilerParams(
            dimension_semantics=("parallel",)),  # independent rows -> megacore
    )(x, w1, b1.reshape(1, NC), w2, b2.reshape(1, NC))
    return out[:M]


def patch_sample_f(feats, mlp_params, key, num_patches=64, patch_ids=None):
    """JAX/Pallas equivalent of PatchSampleF.forward (use_mlp=True).

    feats:      list of (B, C, H, W) feature maps
    mlp_params: list of (w1, b1, w2, b2) per feature map
    Returns (return_feats, return_ids) like the PyTorch module.
    """
    return_feats, return_ids = [], []
    for feat_id, feat in enumerate(feats):
        B, C, H, W = feat.shape
        feat_reshape = jnp.transpose(feat, (0, 2, 3, 1)).reshape(B, H * W, C)
        if num_patches > 0:
            if patch_ids is not None:
                patch_id = patch_ids[feat_id]
            else:
                key, sub = jax.random.split(key)
                patch_id = jax.random.permutation(sub, H * W)[
                    : int(min(num_patches, H * W))]
            x_sample = feat_reshape[:, patch_id, :].reshape(-1, C)
        else:
            # TODO(synk): num_patches == 0 path (full map, quirky Normalize over
            # dim 1, reshape back to (B, nc, H, W)) is not implemented here.
            raise NotImplementedError("num_patches == 0 path not implemented")

        w1, b1, w2, b2 = mlp_params[feat_id]
        x_sample = mlp_l2norm(x_sample, w1, b1, w2, b2)

        return_ids.append(patch_id)
        return_feats.append(x_sample)
    return return_feats, return_ids


def _reference(x, w1, b1, w2, b2, eps=1e-7):
    h = jnp.maximum(x @ w1 + b1, 0.0)
    y = h @ w2 + b2
    norm = jnp.sqrt(jnp.sum(y * y, axis=-1, keepdims=True))
    return y / (norm + eps)


if __name__ == "__main__":
    key = jax.random.PRNGKey(0)
    nc = 256            # PatchSampleF default
    num_patches = 64
    feat_shapes = [(2, 4, 16, 16), (2, 8, 8, 8)]   # two feature maps, like CUT

    k_feats, k_mlps, k_perm = jax.random.split(key, 3)

    feats = []
    for i, shp in enumerate(feat_shapes):
        feats.append(jax.random.normal(jax.random.fold_in(k_feats, i), shp,
                                       dtype=jnp.float32))

    # deterministic synthetic init matching init_weights('normal', gain=0.02):
    # Linear.weight ~ N(0, 0.02), Linear.bias = 0
    mlp_params = []
    for i, shp in enumerate(feat_shapes):
        cin = shp[1]
        k1, k2 = jax.random.split(jax.random.fold_in(k_mlps, i))
        w1 = 0.02 * jax.random.normal(k1, (cin, nc), dtype=jnp.float32)
        b1 = jnp.zeros((nc,), dtype=jnp.float32)
        w2 = 0.02 * jax.random.normal(k2, (nc, nc), dtype=jnp.float32)
        b2 = jnp.zeros((nc,), dtype=jnp.float32)
        mlp_params.append((w1, b1, w2, b2))

    return_feats, return_ids = patch_sample_f(
        feats, mlp_params, k_perm, num_patches=num_patches)
    return_feats = jax.block_until_ready(return_feats)

    # verify against a plain-JAX reference of the same forward pass
    for feat_id, feat in enumerate(feats):
        B, C, H, W = feat.shape
        fr = jnp.transpose(feat, (0, 2, 3, 1)).reshape(B, H * W, C)
        xs = fr[:, return_ids[feat_id], :].reshape(-1, C)
        w1, b1, w2, b2 = mlp_params[feat_id]
        ref = _reference(xs, w1, b1, w2, b2)
        n_sel = return_ids[feat_id].shape[0]
        assert return_feats[feat_id].shape == (B * n_sel, nc)
        assert jnp.allclose(return_feats[feat_id], ref, atol=1e-4, rtol=1e-4), \
            f"mismatch vs reference for feat {feat_id}"

    print("KERNEL_OK")
</pallas_src>

<mosaic_0001>
module attributes {stable_mosaic.version = 11 : i64} {
  func.func @_mlp_l2norm_kernel(%arg0: i32, %arg1: memref<128x4xf32, #tpu.memory_space<vmem>>, %arg2: memref<4x256xf32, #tpu.memory_space<vmem>>, %arg3: memref<1x256xf32, #tpu.memory_space<vmem>>, %arg4: memref<256x256xf32, #tpu.memory_space<vmem>>, %arg5: memref<1x256xf32, #tpu.memory_space<vmem>>, %arg6: memref<128x256xf32, #tpu.memory_space<vmem>>) attributes {dimension_semantics = [#tpu.dimension_semantics<parallel>], iteration_bounds = array<i64: 1>, scalar_prefetch = 0 : i64, scratch_operands = 0 : i64, tpu.core_type = #tpu.core_type<tc>, window_params = [{transform_indices = @transform_0, window_bounds = array<i64: 128, 4>}, {pipeline_mode = #tpu.pipeline_mode<synchronous>, transform_indices = @transform_1, window_bounds = array<i64: 4, 256>}, {pipeline_mode = #tpu.pipeline_mode<synchronous>, transform_indices = @transform_2, window_bounds = array<i64: 1, 256>}, {pipeline_mode = #tpu.pipeline_mode<synchronous>, transform_indices = @transform_3, window_bounds = array<i64: 256, 256>}, {pipeline_mode = #tpu.pipeline_mode<synchronous>, transform_indices = @transform_4, window_bounds = array<i64: 1, 256>}, {transform_indices = @transform_5, window_bounds = array<i64: 128, 256>}]} {
    %c0 = arith.constant 0 : index
    %c0_0 = arith.constant 0 : index
    %0 = vector.load %arg1[%c0, %c0_0] : memref<128x4xf32, #tpu.memory_space<vmem>>, vector<128x4xf32>
    %c0_1 = arith.constant 0 : index
    %c0_2 = arith.constant 0 : index
    %1 = vector.load %arg2[%c0_1, %c0_2] : memref<4x256xf32, #tpu.memory_space<vmem>>, vector<4x256xf32>
    %cst = arith.constant dense<0.000000e+00> : vector<128x256xf32>
    %2 = tpu.matmul %0, %1, %cst {dimension_numbers = #tpu.dot_dimension_numbers<[1], [0], [0], [1], [0, 0, 1, 1], [], []>} : vector<128x4xf32>, vector<4x256xf32>, vector<128x256xf32> -> vector<128x256xf32>
    %c0_3 = arith.constant 0 : index
    %c0_4 = arith.constant 0 : index
    %3 = vector.load %arg3[%c0_3, %c0_4] : memref<1x256xf32, #tpu.memory_space<vmem>>, vector<1x256xf32>
    %4 = vector.broadcast %3 : vector<1x256xf32> to vector<128x256xf32>
    %5 = arith.addf %2, %4 : vector<128x256xf32>
    %cst_5 = arith.constant 0.000000e+00 : f32
    %6 = vector.broadcast %cst_5 : f32 to vector<128x256xf32>
    %7 = arith.maximumf %5, %6 : vector<128x256xf32>
    %c0_6 = arith.constant 0 : index
    %c0_7 = arith.constant 0 : index
    %8 = vector.load %arg4[%c0_6, %c0_7] : memref<256x256xf32, #tpu.memory_space<vmem>>, vector<256x256xf32>
    %cst_8 = arith.constant dense<0.000000e+00> : vector<128x256xf32>
    %9 = tpu.matmul %7, %8, %cst_8 {dimension_numbers = #tpu.dot_dimension_numbers<[1], [0], [0], [1], [0, 0, 1, 1], [], []>} : vector<128x256xf32>, vector<256x256xf32>, vector<128x256xf32> -> vector<128x256xf32>
    %c0_9 = arith.constant 0 : index
    %c0_10 = arith.constant 0 : index
    %10 = vector.load %arg5[%c0_9, %c0_10] : memref<1x256xf32, #tpu.memory_space<vmem>>, vector<1x256xf32>
    %11 = vector.broadcast %10 : vector<1x256xf32> to vector<128x256xf32>
    %12 = arith.addf %9, %11 : vector<128x256xf32>
    %13 = arith.mulf %12, %12 : vector<128x256xf32>
    %cst_11 = arith.constant dense<0.000000e+00> : vector<128xf32>
    %14 = vector.multi_reduction <add>, %13, %cst_11 [1] : vector<128x256xf32> to vector<128xf32>
    %15 = vector.shape_cast %14 : vector<128xf32> to vector<128x1xf32>
    %16 = math.sqrt %15 : vector<128x1xf32>
    %cst_12 = arith.constant 1.000000e-07 : f32
    %17 = vector.broadcast %cst_12 : f32 to vector<128x1xf32>
    %18 = arith.addf %16, %17 : vector<128x1xf32>
    %19 = tpu.reciprocal %18 : vector<128x1xf32> -> vector<128x1xf32>
    %20 = vector.broadcast %19 : vector<128x1xf32> to vector<128x256xf32>
    %21 = arith.mulf %12, %20 : vector<128x256xf32>
    %c0_13 = arith.constant 0 : index
    %c0_14 = arith.constant 0 : index
    %22 = vector.load %arg6[%c0_13, %c0_14] : memref<128x256xf32, #tpu.memory_space<vmem>>, vector<128x256xf32>
    tpu.vector_store %arg6[%c0_13, %c0_14], %21 {strides = array<i32>} : memref<128x256xf32, #tpu.memory_space<vmem>>, vector<128x256xf32>,
    return
  }
  func.func @transform_0(%arg0: i32) -> (i32, i32) {
    %c0_i32 = arith.constant 0 : i32
    %c0_i32_0 = arith.constant 0 : i32
    return %arg0, %c0_i32 : i32, i32
  }
  func.func @transform_1(%arg0: i32) -> (i32, i32) {
    %c0_i32 = arith.constant 0 : i32
    %c0_i32_0 = arith.constant 0 : i32
    %c0_i32_1 = arith.constant 0 : i32
    return %c0_i32, %c0_i32_0 : i32, i32
  }
  func.func @transform_2(%arg0: i32) -> (i32, i32) {
    %c0_i32 = arith.constant 0 : i32
    %c0_i32_0 = arith.constant 0 : i32
    %c0_i32_1 = arith.constant 0 : i32
    return %c0_i32, %c0_i32_0 : i32, i32
  }
  func.func @transform_3(%arg0: i32) -> (i32, i32) {
    %c0_i32 = arith.constant 0 : i32
    %c0_i32_0 = arith.constant 0 : i32
    %c0_i32_1 = arith.constant 0 : i32
    return %c0_i32, %c0_i32_0 : i32, i32
  }
  func.func @transform_4(%arg0: i32) -> (i32, i32) {
    %c0_i32 = arith.constant 0 : i32
    %c0_i32_0 = arith.constant 0 : i32
    %c0_i32_1 = arith.constant 0 : i32
    return %c0_i32, %c0_i32_0 : i32, i32
  }
  func.func @transform_5(%arg0: i32) -> (i32, i32) {
    %c0_i32 = arith.constant 0 : i32
    %c0_i32_0 = arith.constant 0 : i32
    return %arg0, %c0_i32 : i32, i32
  }
}

</mosaic_0001>

<llo_original>
// kernel: tpu_custom_call.1
$region0: #{tpu_custom_call.1}
  #allocation0 [shape = 'u32[]', space=smem, size = 0x4, offset = 0x4, fixed_abs, tag = 'smem constant byte address 0x4 - core index']
  #allocation1 [shape = 'u32[144,128]{1,0:T(1,128)}', space=vmem, size = 0x12000, scoped, tag = 'internal scratch']
  %s0 = inlined_call_operand.vmem [shape: f32[128,4], index: 0, kind: input, shape index: {}]
  %s1 = inlined_call_operand.vmem [shape: f32[4,256], index: 1, kind: input, shape index: {}]
  %s2 = inlined_call_operand.vmem [shape: f32[1,256], index: 2, kind: input, shape index: {}]
  %s3 = inlined_call_operand.hbm [shape: f32[256,256], index: 3, kind: input, shape index: {}]
  %s4 = inlined_call_operand.vmem [shape: f32[1,256], index: 4, kind: input, shape index: {}]
  %s5 = inlined_call_operand.hbm [shape: f32[128,256], index: 5, kind: output, shape index: {}]
  %s6 = sld [smem:[#allocation0]]
  $region34: #{tpu_custom_call.1} parent=0
    _
  %s8 = ssub.s32 1, %s6
  %s9 = scalar_select 0, %s8, %s6
  $region1: #{tpu_custom_call.1} parent=0
    #allocation2 [shape = 'u8[262144]{0}', space=vmem, size = 0x40000, scoped, tag = 'input window, operand 3, single buffered']
    #allocation3 [shape = 's32[1]{0}', space=sflag, size = 0x4, scoped, tag = 'scoped memory for tpu_custom_call.1']
    #allocation4 [shape = 's32[1]{0}', space=sflag, size = 0x4, scoped, tag = 'scoped memory for tpu_custom_call.1']
    #allocation5 [shape = 'u8[131072]{0}', space=vmem, size = 0x20000, scoped, tag = 'output window, operand 0, single buffered']
    %10 = vsyncpa [#allocation3], 0
    %11 = vsyncpa [#allocation4], 0
    // Predicated region
    $region2: #{tpu_custom_call.1} parent=1 // pred_check
      _
    $region3: #{tpu_custom_call.1} parent=1 // pred_check_branch
      %13 = sbr.rel (0) target = $region5
    $region4: #{tpu_custom_call.1} parent=1 // pred_region
      _
    $region5: #{tpu_custom_call.1} parent=1 // pred_fallthru
      _
    // Predicated region
    $region6: #{tpu_custom_call.1} parent=1 // pred_check
      _
    $region7: #{tpu_custom_call.1} parent=1 // pred_check_branch
      %15 = sbr.rel (0) target = $region9
    $region8: #{tpu_custom_call.1} parent=1 // pred_region
      _
    $region9: #{tpu_custom_call.1} parent=1 // pred_fallthru
      _
    // Predicated region
    $region10: #{tpu_custom_call.1} parent=1 // pred_check
      _
    $region11: #{tpu_custom_call.1} parent=1 // pred_check_branch
      %17 = sbr.rel (0) target = $region13
    $region12: #{tpu_custom_call.1} parent=1 // pred_region
      _
    $region13: #{tpu_custom_call.1} parent=1 // pred_fallthru
      _
    // Predicated region
    $region14: #{tpu_custom_call.1} parent=1 // pred_check
      _
    $region15: #{tpu_custom_call.1} parent=1 // pred_check_branch
      %19 = sbr.rel (0) target = $region17
    $region16: #{tpu_custom_call.1} parent=1 // pred_region
      %s21 = ssub.s32 8192, 8192
      %22 = vsyncadd [#allocation3], %s21
      %s23 = sshll.u32 [#allocation2], 4
      %s24 = int_to_ptr.vmem [resolvable:$true] %s23
      %29 = dma.hbm_to_vmem [thread:$0]  %s3, 8192, %s24, [#allocation3], 256, 256, 16
    $region17: #{tpu_custom_call.1} parent=1 // pred_fallthru
      _
    // Predicated region
    $region18: #{tpu_custom_call.1} parent=1 // pred_check
      _
    $region19: #{tpu_custom_call.1} parent=1 // pred_check_branch
      %31 = sbr.rel (0) target = $region21
    $region20: #{tpu_custom_call.1} parent=1 // pred_region
      _
    $region21: #{tpu_custom_call.1} parent=1 // pred_fallthru
      _
    // Predicated region
    $region22: #{tpu_custom_call.1} parent=1 // pred_check
      _
    $region23: #{tpu_custom_call.1} parent=1 // pred_check_branch
      %33 = sbr.rel (0) target = $region25
    $region24: #{tpu_custom_call.1} parent=1 // pred_region
      %34 = dma.done [#allocation3], 8192
    $region25: #{tpu_custom_call.1} parent=1 // pred_fallthru
      _
    %v35 = vld [vmem:[%s0] sm:$0xff]
    %v36 = vld [vmem:[%s0 + $0x8] sm:$0xff]
    %v37 = vld [vmem:[%s0 + $0x10] sm:$0xff]
    %v38 = vld [vmem:[%s0 + $0x18] sm:$0xff]
    %v39 = vld [vmem:[%s0 + $0x20] sm:$0xff]
    %v40 = vld [vmem:[%s0 + $0x28] sm:$0xff]
    %v41 = vld [vmem:[%s0 + $0x30] sm:$0xff]
    %v42 = vld [vmem:[%s0 + $0x38] sm:$0xff]
    %v43 = vld [vmem:[%s0 + $0x40] sm:$0xff]
    %v44 = vld [vmem:[%s0 + $0x48] sm:$0xff]
    %v45 = vld [vmem:[%s0 + $0x50] sm:$0xff]
    %v46 = vld [vmem:[%s0 + $0x58] sm:$0xff]
    %v47 = vld [vmem:[%s0 + $0x60] sm:$0xff]
    %v48 = vld [vmem:[%s0 + $0x68] sm:$0xff]
    %v49 = vld [vmem:[%s0 + $0x70] sm:$0xff]
    %v50 = vld [vmem:[%s0 + $0x78] sm:$0xff]
    %v51 = vld [vmem:[%s1] sm:$0xff]
    %v52 = vld [vmem:[%s2] sm:$0x3]
    %v54 = vlaneseq
    %v55 = vshrl.u32 %v54, 7
    %v56 = vsub.s32 0, %v55
    %v57 = vrot.slane %v52, %v56
    %v58 = vlaneseq
    %v59 = vshrl.u32 %v58, 7
    %v60 = vsub.s32 1, %v59
    %v61 = vrot.slane %v52, %v60
    %v65 = vcombine.high %v51, %v51
    %vm66 = vcmask 31744
    %v68 = vsel %vm66, %v35, 0
    %v71 = vsel %vm66, %v36, 0
    %v74 = vsel %vm66, %v37, 0
    %v77 = vsel %vm66, %v38, 0
    %v80 = vsel %vm66, %v39, 0
    %v83 = vsel %vm66, %v40, 0
    %v86 = vsel %vm66, %v41, 0
    %v89 = vsel %vm66, %v42, 0
    %v92 = vsel %vm66, %v43, 0
    %v95 = vsel %vm66, %v44, 0
    %v98 = vsel %vm66, %v45, 0
    %v101 = vsel %vm66, %v46, 0
    %v104 = vsel %vm66, %v47, 0
    %v107 = vsel %vm66, %v48, 0
    %v110 = vsel %vm66, %v49, 0
    %v113 = vsel %vm66, %v50, 0
    %vm115 = vcmask 1043456
    %v116 = vsel %vm115, %v51, 0
    %v118 = vsel %vm115, %v65, 0
    %120 = vmatprep.subr.mxu0 %v118
    %121 = vmatpush1.msra.mxu0 %v116
    %122 = vmatprep.subr.mxu0 0.0
    %123 = vmatpush1.msra.mxu0 0.0
    %124 = vmatprep.subr.mxu0 0.0
    %125 = vmatpush1.msra.mxu0 0.0
    %126 = vmatprep.subr.mxu0 0.0
    %127 = vmatpush1.msra.mxu0 0.0
    %128 = vmatprep.subr.mxu0 0.0
    %129 = vmatpush1.msra.mxu0 0.0
    %130 = vmatprep.subr.mxu0 0.0
    %131 = vmatpush1.msra.mxu0 0.0
    %132 = vmatprep.subr.mxu0 0.0
    %133 = vmatpush1.msra.mxu0 0.0
    %134 = vmatprep.subr.mxu0 0.0
    %135 = vmatpush1.msra.mxu0 0.0
    %136 = vmatprep.subr.mxu0 0.0
    %137 = vmatpush1.msra.mxu0 0.0
    %138 = vmatprep.subr.mxu0 0.0
    %139 = vmatpush1.msra.mxu0 0.0
    %140 = vmatprep.subr.mxu0 0.0
    %141 = vmatpush1.msra.mxu0 0.0
    %142 = vmatprep.subr.mxu0 0.0
    %143 = vmatpush1.msra.mxu0 0.0
    %144 = vmatprep.subr.mxu0 0.0
    %145 = vmatpush1.msra.mxu0 0.0
    %146 = vmatprep.subr.mxu0 0.0
    %147 = vmatpush1.msra.mxu0 0.0
    %148 = vmatprep.subr.mxu0 0.0
    %149 = vmatpush1.msra.mxu0 0.0
    %150 = vmatprep.subr.mxu0 0.0
    %151 = vmatpush1.msra.mxu0 0.0
    %152 = vmatprep.subr.mxu0 0.0
    %153 = vmatpush1.msra.mxu0 0.0
    %154 = vmatprep.subr.mxu0 0.0
    %155 = vmatpush1.msra.mxu0 0.0
    %156 = vmatprep.subr.mxu0 0.0
    %157 = vmatpush1.msra.mxu0 0.0
    %158 = vmatprep.subr.mxu0 0.0
    %159 = vmatpush1.msra.mxu0 0.0
    %160 = vmatprep.subr.mxu0 0.0
    %161 = vmatpush1.msra.mxu0 0.0
    %162 = vmatprep.subr.mxu0 0.0
    %163 = vmatpush1.msra.mxu0 0.0
    %164 = vmatprep.subr.mxu0 0.0
    %165 = vmatpush1.msra.mxu0 0.0
    %166 = vmatprep.subr.mxu0 0.0
    %167 = vmatpush1.msra.mxu0 0.0
    %168 = vmatprep.subr.mxu0 0.0
    %169 = vmatpush1.msra.mxu0 0.0
    %170 = vmatprep.subr.mxu0 0.0
    %171 = vmatpush1.msra.mxu0 0.0
    %172 = vmatprep.subr.mxu0 0.0
    %173 = vmatpush1.msra.mxu0 0.0
    %174 = vmatprep.subr.mxu0 0.0
    %175 = vmatpush1.msra.mxu0 0.0
    %176 = vmatprep.subr.mxu0 0.0
    %177 = vmatpush1.msra.mxu0 0.0
    %178 = vmatprep.subr.mxu0 0.0
    %179 = vmatpush1.msra.mxu0 0.0
    %180 = vmatprep.subr.mxu0 0.0
    %181 = vmatpush1.msra.mxu0 0.0
    %182 = vmatprep.subr.mxu0 0.0
    %183 = vmatpush1.msra.mxu0 0.0
    %184 = vmatprep.mubr.f32.mxu0 0.0
    %185 = vmatmul.mubr.f32.gmra.mrb[0].mxu0 %v68
    %v186 = vpop.f32.mrb[0].mxu0
    %v187 = vadd.f32 %v57, %v186
    %v188 = vpop.f32.mrb[0].mxu0
    %v189 = vadd.f32 %v61, %v188
    %190 = vmatprep.mubr.f32.mxu0 0.0
    %191 = vmatmul.mubr.f32.gmra.mrb[0].mxu0 %v71
    %v192 = vpop.f32.mrb[0].mxu0
    %v193 = vadd.f32 %v57, %v192
    %v194 = vpop.f32.mrb[0].mxu0
    %v195 = vadd.f32 %v61, %v194
    %196 = vmatprep.mubr.f32.mxu0 0.0
    %197 = vmatmul.mubr.f32.gmra.mrb[0].mxu0 %v74
    %v198 = vpop.f32.mrb[0].mxu0
    %v199 = vadd.f32 %v57, %v198
    %v200 = vpop.f32.mrb[0].mxu0
    %v201 = vadd.f32 %v61, %v200
    %202 = vmatprep.mubr.f32.mxu0 0.0
    %203 = vmatmul.mubr.f32.gmra.mrb[0].mxu0 %v77
    %v204 = vpop.f32.mrb[0].mxu0
    %v205 = vadd.f32 %v57, %v204
    %v206 = vpop.f32.mrb[0].mxu0
    %v207 = vadd.f32 %v61, %v206
    %208 = vmatprep.mubr.f32.mxu0 0.0
    %209 = vmatmul.mubr.f32.gmra.mrb[0].mxu0 %v80
    %v210 = vpop.f32.mrb[0].mxu0
    %v211 = vadd.f32 %v57, %v210
    %v212 = vpop.f32.mrb[0].mxu0
    %v213 = vadd.f32 %v61, %v212
    %214 = vmatprep.mubr.f32.mxu0 0.0
    %215 = vmatmul.mubr.f32.gmra.mrb[0].mxu0 %v83
    %v216 = vpop.f32.mrb[0].mxu0
    %v217 = vadd.f32 %v57, %v216
    %v218 = vpop.f32.mrb[0].mxu0
    %v219 = vadd.f32 %v61, %v218
    %220 = vmatprep.mubr.f32.mxu0 0.0
    %221 = vmatmul.mubr.f32.gmra.mrb[0].mxu0 %v86
    %v222 = vpop.f32.mrb[0].mxu0
    %v223 = vadd.f32 %v57, %v222
    %v224 = vpop.f32.mrb[0].mxu0
    %v225 = vadd.f32 %v61, %v224
    %226 = vmatprep.mubr.f32.mxu0 0.0
    %227 = vmatmul.mubr.f32.gmra.mrb[0].mxu0 %v89
    %v228 = vpop.f32.mrb[0].mxu0
    %v229 = vadd.f32 %v57, %v228
    %v230 = vpop.f32.mrb[0].mxu0
    %v231 = vadd.f32 %v61, %v230
    %232 = vmatprep.mubr.f32.mxu0 0.0
    %233 = vmatmul.mubr.f32.gmra.mrb[0].mxu0 %v92
    %v234 = vpop.f32.mrb[0].mxu0
    %v235 = vadd.f32 %v57, %v234
    %v236 = vpop.f32.mrb[0].mxu0
    %v237 = vadd.f32 %v61, %v236
    %238 = vmatprep.mubr.f32.mxu0 0.0
    %239 = vmatmul.mubr.f32.gmra.mrb[0].mxu0 %v95
    %v240 = vpop.f32.mrb[0].mxu0
    %v241 = vadd.f32 %v57, %v240
    %v242 = vpop.f32.mrb[0].mxu0
    %v243 = vadd.f32 %v61, %v242
    %244 = vmatprep.mubr.f32.mxu0 0.0
    %245 = vmatmul.mubr.f32.gmra.mrb[0].mxu0 %v98
    %v246 = vpop.f32.mrb[0].mxu0
    %v247 = vadd.f32 %v57, %v246
    %v248 = vpop.f32.mrb[0].mxu0
    %v249 = vadd.f32 %v61, %v248
    %250 = vmatprep.mubr.f32.mxu0 0.0
    %251 = vmatmul.mubr.f32.gmra.mrb[0].mxu0 %v101
    %v252 = vpop.f32.mrb[0].mxu0
    %v253 = vadd.f32 %v57, %v252
    %v254 = vpop.f32.mrb[0].mxu0
    %v255 = vadd.f32 %v61, %v254
    %256 = vmatprep.mubr.f32.mxu0 0.0
    %257 = vmatmul.mubr.f32.gmra.mrb[0].mxu0 %v104
    %v258 = vpop.f32.mrb[0].mxu0
    %v259 = vadd.f32 %v57, %v258
    %v260 = vpop.f32.mrb[0].mxu0
    %v261 = vadd.f32 %v61, %v260
    %262 = vmatprep.mubr.f32.mxu0 0.0
    %263 = vmatmul.mubr.f32.gmra.mrb[0].mxu0 %v107
    %v264 = vpop.f32.mrb[0].mxu0
    %v265 = vadd.f32 %v57, %v264
    %v266 = vpop.f32.mrb[0].mxu0
    %v267 = vadd.f32 %v61, %v266
    %268 = vmatprep.mubr.f32.mxu0 0.0
    %269 = vmatmul.mubr.f32.gmra.mrb[0].mxu0 %v110
    %v270 = vpop.f32.mrb[0].mxu0
    %v271 = vadd.f32 %v57, %v270
    %v272 = vpop.f32.mrb[0].mxu0
    %v273 = vadd.f32 %v61, %v272
    %274 = vmatprep.mubr.f32.mxu0 0.0
    %275 = vmatmul.mubr.f32.gmra.mrb[0].mxu0 %v113
    %v276 = vpop.f32.mrb[0].mxu0
    %v277 = vadd.f32 %v57, %v276
    %v278 = vpop.f32.mrb[0].mxu0
    %v279 = vadd.f32 %v61, %v278
    %280 = vdwg.mxu0
    %v281 = vmax.f32 %v187, 0.0
    %v282 = vmax.f32 %v189, 0.0
    %v283 = vmax.f32 %v193, 0.0
    %v284 = vmax.f32 %v195, 0.0
    %v285 = vmax.f32 %v199, 0.0
    %v286 = vmax.f32 %v201, 0.0
    %v287 = vmax.f32 %v205, 0.0
    %v288 = vmax.f32 %v207, 0.0
    %v289 = vmax.f32 %v211, 0.0
    %v290 = vmax.f32 %v213, 0.0
    %v291 = vmax.f32 %v217, 0.0
    %v292 = vmax.f32 %v219, 0.0
    %v293 = vmax.f32 %v223, 0.0
    %v294 = vmax.f32 %v225, 0.0
    %v295 = vmax.f32 %v229, 0.0
    %v296 = vmax.f32 %v231, 0.0
    %v297 = vmax.f32 %v235, 0.0
    %v298 = vmax.f32 %v237, 0.0
    %v299 = vmax.f32 %v241, 0.0
    %v300 = vmax.f32 %v243, 0.0
    %v301 = vmax.f32 %v247, 0.0
    %v302 = vmax.f32 %v249, 0.0
    %v303 = vmax.f32 %v253, 0.0
    %v304 = vmax.f32 %v255, 0.0
    %v305 = vmax.f32 %v259, 0.0
    %v306 = vmax.f32 %v261, 0.0
    %v307 = vmax.f32 %v265, 0.0
    %v308 = vmax.f32 %v267, 0.0
    %v309 = vmax.f32 %v271, 0.0
    %v310 = vmax.f32 %v273, 0.0
    %v311 = vmax.f32 %v277, 0.0
    %v312 = vmax.f32 %v279, 0.0
    %v313 = vld [vmem:[#allocation2] sm:$0xff]
    %v314 = vld [vmem:[#allocation2 + $0x8] sm:$0xff]
    %v315 = vld [vmem:[#allocation2 + $0x10] sm:$0xff]
    %v316 = vld [vmem:[#allocation2 + $0x18] sm:$0xff]
    %v317 = vld [vmem:[#allocation2 + $0x20] sm:$0xff]
    %v318 = vld [vmem:[#allocation2 + $0x28] sm:$0xff]
    %v319 = vld [vmem:[#allocation2 + $0x30] sm:$0xff]
    %v320 = vld [vmem:[#allocation2 + $0x38] sm:$0xff]
    %v321 = vld [vmem:[#allocation2 + $0x40] sm:$0xff]
    %v322 = vld [vmem:[#allocation2 + $0x48] sm:$0xff]
    %v323 = vld [vmem:[#allocation2 + $0x50] sm:$0xff]
    %v324 = vld [vmem:[#allocation2 + $0x58] sm:$0xff]
    %v325 = vld [vmem:[#allocation2 + $0x60] sm:$0xff]
    %v326 = vld [vmem:[#allocation2 + $0x68] sm:$0xff]
    %v327 = vld [vmem:[#allocation2 + $0x70] sm:$0xff]
    %v328 = vld [vmem:[#allocation2 + $0x78] sm:$0xff]
    %v329 = vld [vmem:[#allocation2 + $0x80] sm:$0xff]
    %v330 = vld [vmem:[#allocation2 + $0x88] sm:$0xff]
    %v331 = vld [vmem:[#allocation2 + $0x90] sm:$0xff]
    %v332 = vld [vmem:[#allocation2 + $0x98] sm:$0xff]
    %v333 = vld [vmem:[#allocation2 + $0xa0] sm:$0xff]
    %v334 = vld [vmem:[#allocation2 + $0xa8] sm:$0xff]
    %v335 = vld [vmem:[#allocation2 + $0xb0] sm:$0xff]
    %v336 = vld [vmem:[#allocation2 + $0xb8] sm:$0xff]
    %v337 = vld [vmem:[#allocation2 + $0xc0] sm:$0xff]
    %v338 = vld [vmem:[#allocation2 + $0xc8] sm:$0xff]
    %v339 = vld [vmem:[#allocation2 + $0xd0] sm:$0xff]
    %v340 = vld [vmem:[#allocation2 + $0xd8] sm:$0xff]
    %v341 = vld [vmem:[#allocation2 + $0xe0] sm:$0xff]
    %v342 = vld [vmem:[#allocation2 + $0xe8] sm:$0xff]
    %v343 = vld [vmem:[#allocation2 + $0xf0] sm:$0xff]
    %v344 = vld [vmem:[#allocation2 + $0xf8] sm:$0xff]
    %v345 = vld [vmem:[#allocation2 + $0x100] sm:$0xff]
    %v346 = vld [vmem:[#allocation2 + $0x108] sm:$0xff]
    %v347 = vld [vmem:[#allocation2 + $0x110] sm:$0xff]
    %v348 = vld [vmem:[#allocation2 + $0x118] sm:$0xff]
    %v349 = vld [vmem:[#allocation2 + $0x120] sm:$0xff]
    %v350 = vld [vmem:[#allocation2 + $0x128] sm:$0xff]
    %v351 = vld [vmem:[#allocation2 + $0x130] sm:$0xff]
    %v352 = vld [vmem:[#allocation2 + $0x138] sm:$0xff]
    %v353 = vld [vmem:[#allocation2 + $0x140] sm:$0xff]
    %v354 = vld [vmem:[#allocation2 + $0x148] sm:$0xff]
    %v355 = vld [vmem:[#allocation2 + $0x150] sm:$0xff]
    %v356 = vld [vmem:[#allocation2 + $0x158] sm:$0xff]
    %v357 = vld [vmem:[#allocation2 + $0x160] sm:$0xff]
    %v358 = vld [vmem:[#allocation2 + $0x168] sm:$0xff]
    %v359 = vld [vmem:[#allocation2 + $0x170] sm:$0xff]
    %v360 = vld [vmem:[#allocation2 + $0x178] sm:$0xff]
    %v361 = vld [vmem:[#allocation2 + $0x180] sm:$0xff]
    %v362 = vld [vmem:[#allocation2 + $0x188] sm:$0xff]
    %v363 = vld [vmem:[#allocation2 + $0x190] sm:$0xff]
    %v364 = vld [vmem:[#allocation2 + $0x198] sm:$0xff]
    %v365 = vld [vmem:[#allocation2 + $0x1a0] sm:$0xff]
    %v366 = vld [vmem:[#allocation2 + $0x1a8] sm:$0xff]
    %v367 = vld [vmem:[#allocation2 + $0x1b0] sm:$0xff]
    %v368 = vld [vmem:[#allocation2 + $0x1b8] sm:$0xff]
    %v369 = vld [vmem:[#allocation2 + $0x1c0] sm:$0xff]
    %v370 = vld [vmem:[#allocation2 + $0x1c8] sm:$0xff]
    %v371 = vld [vmem:[#allocation2 + $0x1d0] sm:$0xff]
    %v372 = vld [vmem:[#allocation2 + $0x1d8] sm:$0xff]
    %v373 = vld [vmem:[#allocation2 + $0x1e0] sm:$0xff]
    %v374 = vld [vmem:[#allocation2 + $0x1e8] sm:$0xff]
    %v375 = vld [vmem:[#allocation2 + $0x1f0] sm:$0xff]
    %v376 = vld [vmem:[#allocation2 + $0x1f8] sm:$0xff]
    %v377 = vld [vmem:[%s4] sm:$0x3]
    %v379 = vlaneseq
    %v380 = vshrl.u32 %v379, 7
    %v381 = vsub.s32 0, %v380
    %v382 = vrot.slane %v377, %v381
    %v383 = vlaneseq
    %v384 = vshrl.u32 %v383, 7
    %v385 = vsub.s32 1, %v384
    %v386 = vrot.slane %v377, %v385
    %389 = vmatprep.subr.mxu0 %v314
    %390 = vmatpush1.msra.mxu0 %v313
    %391 = vmatprep.subr.mxu0 %v316
    %392 = vmatpush1.msra.mxu0 %v315
    %393 = vmatprep.subr.mxu0 %v318
    %394 = vmatpush1.msra.mxu0 %v317
    %395 = vmatprep.subr.mxu0 %v320
    %396 = vmatpush1.msra.mxu0 %v319
    %397 = vmatprep.subr.mxu0 %v322
    %398 = vmatpush1.msra.mxu0 %v321
    %399 = vmatprep.subr.mxu0 %v324
    %400 = vmatpush1.msra.mxu0 %v323
    %401 = vmatprep.subr.mxu0 %v326
    %402 = vmatpush1.msra.mxu0 %v325
    %403 = vmatprep.subr.mxu0 %v328
    %404 = vmatpush1.msra.mxu0 %v327
    %405 = vmatprep.subr.mxu0 %v330
    %406 = vmatpush1.msra.mxu0 %v329
    %407 = vmatprep.subr.mxu0 %v332
    %408 = vmatpush1.msra.mxu0 %v331
    %409 = vmatprep.subr.mxu0 %v334
    %410 = vmatpush1.msra.mxu0 %v333
    %411 = vmatprep.subr.mxu0 %v336
    %412 = vmatpush1.msra.mxu0 %v335
    %413 = vmatprep.subr.mxu0 %v338
    %414 = vmatpush1.msra.mxu0 %v337
    %415 = vmatprep.subr.mxu0 %v340
    %416 = vmatpush1.msra.mxu0 %v339
    %417 = vmatprep.subr.mxu0 %v342
    %418 = vmatpush1.msra.mxu0 %v341
    %419 = vmatprep.subr.mxu0 %v344
    %420 = vmatpush1.msra.mxu0 %v343
    %421 = vmatprep.subr.mxu0 %v346
    %422 = vmatpush1.msra.mxu0 %v345
    %423 = vmatprep.subr.mxu0 %v348
    %424 = vmatpush1.msra.mxu0 %v347
    %425 = vmatprep.subr.mxu0 %v350
    %426 = vmatpush1.msra.mxu0 %v349
    %427 = vmatprep.subr.mxu0 %v352
    %428 = vmatpush1.msra.mxu0 %v351
    %429 = vmatprep.subr.mxu0 %v354
    %430 = vmatpush1.msra.mxu0 %v353
    %431 = vmatprep.subr.mxu0 %v356
    %432 = vmatpush1.msra.mxu0 %v355
    %433 = vmatprep.subr.mxu0 %v358
    %434 = vmatpush1.msra.mxu0 %v357
    %435 = vmatprep.subr.mxu0 %v360
    %436 = vmatpush1.msra.mxu0 %v359
    %437 = vmatprep.subr.mxu0 %v362
    %438 = vmatpush1.msra.mxu0 %v361
    %439 = vmatprep.subr.mxu0 %v364
    %440 = vmatpush1.msra.mxu0 %v363
    %441 = vmatprep.subr.mxu0 %v366
    %442 = vmatpush1.msra.mxu0 %v365
    %443 = vmatprep.subr.mxu0 %v368
    %444 = vmatpush1.msra.mxu0 %v367
    %445 = vmatprep.subr.mxu0 %v370
    %446 = vmatpush1.msra.mxu0 %v369
    %447 = vmatprep.subr.mxu0 %v372
    %448 = vmatpush1.msra.mxu0 %v371
    %449 = vmatprep.subr.mxu0 %v374
    %450 = vmatpush1.msra.mxu0 %v373
    %451 = vmatprep.subr.mxu0 %v376
    %452 = vmatpush1.msra.mxu0 %v375
    %453 = vmatprep.mubr.f32.mxu0 %v282
    %454 = vmatmul.mubr.f32.gmra.mrb[0].mxu0 %v281
    %v455 = vpop.f32.mrb[0].mxu0
    %v456 = vadd.f32 %v382, %v455
    %v457 = vpop.f32.mrb[0].mxu0
    %v458 = vadd.f32 %v386, %v457
    %459 = vmatprep.mubr.f32.mxu0 %v284
    %460 = vmatmul.mubr.f32.gmra.mrb[0].mxu0 %v283
    %v461 = vpop.f32.mrb[0].mxu0
    %v462 = vadd.f32 %v382, %v461
    %v463 = vpop.f32.mrb[0].mxu0
    %v464 = vadd.f32 %v386, %v463
    %465 = vmatprep.mubr.f32.mxu0 %v286
    %466 = vmatmul.mubr.f32.gmra.mrb[0].mxu0 %v285
    %v467 = vpop.f32.mrb[0].mxu0
    %v468 = vadd.f32 %v382, %v467
    %v469 = vpop.f32.mrb[0].mxu0
    %v470 = vadd.f32 %v386, %v469
    %471 = vmatprep.mubr.f32.mxu0 %v288
    %472 = vmatmul.mubr.f32.gmra.mrb[0].mxu0 %v287
    %v473 = vpop.f32.mrb[0].mxu0
    %v474 = vadd.f32 %v382, %v473
    %v475 = vpop.f32.mrb[0].mxu0
    %v476 = vadd.f32 %v386, %v475
    %477 = vmatprep.mubr.f32.mxu0 %v290
    %478 = vmatmul.mubr.f32.gmra.mrb[0].mxu0 %v289
    %v479 = vpop.f32.mrb[0].mxu0
    %v480 = vadd.f32 %v382, %v479
    %v481 = vpop.f32.mrb[0].mxu0
    %v482 = vadd.f32 %v386, %v481
    %483 = vmatprep.mubr.f32.mxu0 %v292
    %484 = vmatmul.mubr.f32.gmra.mrb[0].mxu0 %v291
    %v485 = vpop.f32.mrb[0].mxu0
    %v486 = vadd.f32 %v382, %v485
    %v487 = vpop.f32.mrb[0].mxu0
    %v488 = vadd.f32 %v386, %v487
    %489 = vmatprep.mubr.f32.mxu0 %v294
    %490 = vmatmul.mubr.f32.gmra.mrb[0].mxu0 %v293
    %v491 = vpop.f32.mrb[0].mxu0
    %v492 = vadd.f32 %v382, %v491
    %v493 = vpop.f32.mrb[0].mxu0
    %v494 = vadd.f32 %v386, %v493
    %495 = vmatprep.mubr.f32.mxu0 %v296
    %496 = vmatmul.mubr.f32.gmra.mrb[0].mxu0 %v295
    %v497 = vpop.f32.mrb[0].mxu0
    %v498 = vadd.f32 %v382, %v497
    %v499 = vpop.f32.mrb[0].mxu0
    %v500 = vadd.f32 %v386, %v499
    %501 = vmatprep.mubr.f32.mxu0 %v298
    %502 = vmatmul.mubr.f32.gmra.mrb[0].mxu0 %v297
    %v503 = vpop.f32.mrb[0].mxu0
    %v504 = vadd.f32 %v382, %v503
    %v505 = vpop.f32.mrb[0].mxu0
    %v506 = vadd.f32 %v386, %v505
    %507 = vmatprep.mubr.f32.mxu0 %v300
    %508 = vmatmul.mubr.f32.gmra.mrb[0].mxu0 %v299
    %v509 = vpop.f32.mrb[0].mxu0
    %v510 = vadd.f32 %v382, %v509
    %v511 = vpop.f32.mrb[0].mxu0
    %v512 = vadd.f32 %v386, %v511
    %513 = vmatprep.mubr.f32.mxu0 %v302
    %514 = vmatmul.mubr.f32.gmra.mrb[0].mxu0 %v301
    %v515 = vpop.f32.mrb[0].mxu0
    %v516 = vadd.f32 %v382, %v515
    %v517 = vpop.f32.mrb[0].mxu0
    %v518 = vadd.f32 %v386, %v517
    %519 = vmatprep.mubr.f32.mxu0 %v304
    %520 = vmatmul.mubr.f32.gmra.mrb[0].mxu0 %v303
    %v521 = vpop.f32.mrb[0].mxu0
    %v522 = vadd.f32 %v382, %v521
    %v523 = vpop.f32.mrb[0].mxu0
    %v524 = vadd.f32 %v386, %v523
    %525 = vmatprep.mubr.f32.mxu0 %v306
    %526 = vmatmul.mubr.f32.gmra.mrb[0].mxu0 %v305
    %v527 = vpop.f32.mrb[0].mxu0
    %v528 = vadd.f32 %v382, %v527
    %v529 = vpop.f32.mrb[0].mxu0
    %v530 = vadd.f32 %v386, %v529
    %531 = vmatprep.mubr.f32.mxu0 %v308
    %532 = vmatmul.mubr.f32.gmra.mrb[0].mxu0 %v307
    %v533 = vpop.f32.mrb[0].mxu0
    %v534 = vadd.f32 %v382, %v533
    %v535 = vpop.f32.mrb[0].mxu0
    %v536 = vadd.f32 %v386, %v535
    %537 = vmatprep.mubr.f32.mxu0 %v310
    %538 = vmatmul.mubr.f32.gmra.mrb[0].mxu0 %v309
    %v539 = vpop.f32.mrb[0].mxu0
    %v540 = vadd.f32 %v382, %v539
    %v541 = vpop.f32.mrb[0].mxu0
    %v542 = vadd.f32 %v386, %v541
    %543 = vmatprep.mubr.f32.mxu0 %v312
    %544 = vmatmul.mubr.f32.gmra.mrb[0].mxu0 %v311
    %v545 = vpop.f32.mrb[0].mxu0
    %v546 = vadd.f32 %v382, %v545
    %v547 = vpop.f32.mrb[0].mxu0
    %v548 = vadd.f32 %v386, %v547
    %549 = vdwg.mxu0
    %v550 = vmul.f32 %v456, %v456
    %v551 = vmul.f32 %v458, %v458
    %v552 = vmul.f32 %v462, %v462
    %v553 = vmul.f32 %v464, %v464
    %v554 = vmul.f32 %v468, %v468
    %v555 = vmul.f32 %v470, %v470
    %v556 = vmul.f32 %v474, %v474
    %v557 = vmul.f32 %v476, %v476
    %v558 = vmul.f32 %v480, %v480
    %v559 = vmul.f32 %v482, %v482
    %v560 = vmul.f32 %v486, %v486
    %v561 = vmul.f32 %v488, %v488
    %v562 = vmul.f32 %v492, %v492
    %v563 = vmul.f32 %v494, %v494
    %v564 = vmul.f32 %v498, %v498
    %v565 = vmul.f32 %v500, %v500
    %v566 = vmul.f32 %v504, %v504
    %v567 = vmul.f32 %v506, %v506
    %v568 = vmul.f32 %v510, %v510
    %v569 = vmul.f32 %v512, %v512
    %v570 = vmul.f32 %v516, %v516
    %v571 = vmul.f32 %v518, %v518
    %v572 = vmul.f32 %v522, %v522
    %v573 = vmul.f32 %v524, %v524
    %v574 = vmul.f32 %v528, %v528
    %v575 = vmul.f32 %v530, %v530
    %v576 = vmul.f32 %v534, %v534
    %v577 = vmul.f32 %v536, %v536
    %v578 = vmul.f32 %v540, %v540
    %v579 = vmul.f32 %v542, %v542
    %v580 = vmul.f32 %v546, %v546
    %v581 = vmul.f32 %v548, %v548
    %v582 = vadd.f32 %v550, %v551
    %583 = vadd.xlane.f32.xlu0 %v582
    %v584 = vpop.xlane.xlu0 %583
    %v585 = vadd.f32 %v552, %v553
    %586 = vadd.xlane.f32.xlu0 %v585
    %v587 = vpop.xlane.xlu0 %586
    %v588 = vadd.f32 %v554, %v555
    %589 = vadd.xlane.f32.xlu0 %v588
    %v590 = vpop.xlane.xlu0 %589
    %v591 = vadd.f32 %v556, %v557
    %592 = vadd.xlane.f32.xlu0 %v591
    %v593 = vpop.xlane.xlu0 %592
    %v594 = vadd.f32 %v558, %v559
    %595 = vadd.xlane.f32.xlu0 %v594
    %v596 = vpop.xlane.xlu0 %595
    %v597 = vadd.f32 %v560, %v561
    %598 = vadd.xlane.f32.xlu0 %v597
    %v599 = vpop.xlane.xlu0 %598
    %v600 = vadd.f32 %v562, %v563
    %601 = vadd.xlane.f32.xlu0 %v600
    %v602 = vpop.xlane.xlu0 %601
    %v603 = vadd.f32 %v564, %v565
    %604 = vadd.xlane.f32.xlu0 %v603
    %v605 = vpop.xlane.xlu0 %604
    %v606 = vadd.f32 %v566, %v567
    %607 = vadd.xlane.f32.xlu0 %v606
    %v608 = vpop.xlane.xlu0 %607
    %v609 = vadd.f32 %v568, %v569
    %610 = vadd.xlane.f32.xlu0 %v609
    %v611 = vpop.xlane.xlu0 %610
    %v612 = vadd.f32 %v570, %v571
    %613 = vadd.xlane.f32.xlu0 %v612
    %v614 = vpop.xlane.xlu0 %613
    %v615 = vadd.f32 %v572, %v573
    %616 = vadd.xlane.f32.xlu0 %v615
    %v617 = vpop.xlane.xlu0 %616
    %v618 = vadd.f32 %v574, %v575
    %619 = vadd.xlane.f32.xlu0 %v618
    %v620 = vpop.xlane.xlu0 %619
    %v621 = vadd.f32 %v576, %v577
    %622 = vadd.xlane.f32.xlu0 %v621
    %v623 = vpop.xlane.xlu0 %622
    %v624 = vadd.f32 %v578, %v579
    %625 = vadd.xlane.f32.xlu0 %v624
    %v626 = vpop.xlane.xlu0 %625
    %v627 = vadd.f32 %v580, %v581
    %628 = vadd.xlane.f32.xlu0 %v627
    %v629 = vpop.xlane.xlu0 %628
    %v630 = vrsqrt.pop %v584
    %v631 = vmul.f32 %v584, %v630
    %vm632 = vcmp.eq.f32.partialorder %v584, inf
    %v633 = vsel %vm632, %v584, %v631
    %vm634 = vcmp.eq.f32.partialorder %v584, 0.0
    %v635 = vand.u32 %v584, 2147483648
    %v636 = vsel %vm634, %v635, %v633
    %v637 = vrsqrt.pop %v587
    %v638 = vmul.f32 %v587, %v637
    %vm639 = vcmp.eq.f32.partialorder %v587, inf
    %v640 = vsel %vm639, %v587, %v638
    %vm641 = vcmp.eq.f32.partialorder %v587, 0.0
    %v642 = vand.u32 %v587, 2147483648
    %v643 = vsel %vm641, %v642, %v640
    %v644 = vrsqrt.pop %v590
    %v645 = vmul.f32 %v590, %v644
    %vm646 = vcmp.eq.f32.partialorder %v590, inf
    %v647 = vsel %vm646, %v590, %v645
    %vm648 = vcmp.eq.f32.partialorder %v590, 0.0
    %v649 = vand.u32 %v590, 2147483648
    %v650 = vsel %vm648, %v649, %v647
    %v651 = vrsqrt.pop %v593
    %v652 = vmul.f32 %v593, %v651
    %vm653 = vcmp.eq.f32.partialorder %v593, inf
    %v654 = vsel %vm653, %v593, %v652
    %vm655 = vcmp.eq.f32.partialorder %v593, 0.0
    %v656 = vand.u32 %v593, 2147483648
    %v657 = vsel %vm655, %v656, %v654
    %v658 = vrsqrt.pop %v596
    %v659 = vmul.f32 %v596, %v658
    %vm660 = vcmp.eq.f32.partialorder %v596, inf
    %v661 = vsel %vm660, %v596, %v659
    %vm662 = vcmp.eq.f32.partialorder %v596, 0.0
    %v663 = vand.u32 %v596, 2147483648
    %v664 = vsel %vm662, %v663, %v661
    %v665 = vrsqrt.pop %v599
    %v666 = vmul.f32 %v599, %v665
    %vm667 = vcmp.eq.f32.partialorder %v599, inf
    %v668 = vsel %vm667, %v599, %v666
    %vm669 = vcmp.eq.f32.partialorder %v599, 0.0
    %v670 = vand.u32 %v599, 2147483648
    %v671 = vsel %vm669, %v670, %v668
    %v672 = vrsqrt.pop %v602
    %v673 = vmul.f32 %v602, %v672
    %vm674 = vcmp.eq.f32.partialorder %v602, inf
    %v675 = vsel %vm674, %v602, %v673
    %vm676 = vcmp.eq.f32.partialorder %v602, 0.0
    %v677 = vand.u32 %v602, 2147483648
    %v678 = vsel %vm676, %v677, %v675
    %v679 = vrsqrt.pop %v605
    %v680 = vmul.f32 %v605, %v679
    %vm681 = vcmp.eq.f32.partialorder %v605, inf
    %v682 = vsel %vm681, %v605, %v680
    %vm683 = vcmp.eq.f32.partialorder %v605, 0.0
    %v684 = vand.u32 %v605, 2147483648
    %v685 = vsel %vm683, %v684, %v682
    %v686 = vrsqrt.pop %v608
    %v687 = vmul.f32 %v608, %v686
    %vm688 = vcmp.eq.f32.partialorder %v608, inf
    %v689 = vsel %vm688, %v608, %v687
    %vm690 = vcmp.eq.f32.partialorder %v608, 0.0
    %v691 = vand.u32 %v608, 2147483648
    %v692 = vsel %vm690, %v691, %v689
    %v693 = vrsqrt.pop %v611
    %v694 = vmul.f32 %v611, %v693
    %vm695 = vcmp.eq.f32.partialorder %v611, inf
    %v696 = vsel %vm695, %v611, %v694
    %vm697 = vcmp.eq.f32.partialorder %v611, 0.0
    %v698 = vand.u32 %v611, 2147483648
    %v699 = vsel %vm697, %v698, %v696
    %v700 = vrsqrt.pop %v614
    %v701 = vmul.f32 %v614, %v700
    %vm702 = vcmp.eq.f32.partialorder %v614, inf
    %v703 = vsel %vm702, %v614, %v701
    %vm704 = vcmp.eq.f32.partialorder %v614, 0.0
    %v705 = vand.u32 %v614, 2147483648
    %v706 = vsel %vm704, %v705, %v703
    %v707 = vrsqrt.pop %v617
    %v708 = vmul.f32 %v617, %v707
    %vm709 = vcmp.eq.f32.partialorder %v617, inf
    %v710 = vsel %vm709, %v617, %v708
    %vm711 = vcmp.eq.f32.partialorder %v617, 0.0
    %v712 = vand.u32 %v617, 2147483648
    %v713 = vsel %vm711, %v712, %v710
    %v714 = vrsqrt.pop %v620
    %v715 = vmul.f32 %v620, %v714
    %vm716 = vcmp.eq.f32.partialorder %v620, inf
    %v717 = vsel %vm716, %v620, %v715
    %vm718 = vcmp.eq.f32.partialorder %v620, 0.0
    %v719 = vand.u32 %v620, 2147483648
    %v720 = vsel %vm718, %v719, %v717
    %v721 = vrsqrt.pop %v623
    %v722 = vmul.f32 %v623, %v721
    %vm723 = vcmp.eq.f32.partialorder %v623, inf
    %v724 = vsel %vm723, %v623, %v722
    %vm725 = vcmp.eq.f32.partialorder %v623, 0.0
    %v726 = vand.u32 %v623, 2147483648
    %v727 = vsel %vm725, %v726, %v724
    %v728 = vrsqrt.pop %v626
    %v729 = vmul.f32 %v626, %v728
    %vm730 = vcmp.eq.f32.partialorder %v626, inf
    %v731 = vsel %vm730, %v626, %v729
    %vm732 = vcmp.eq.f32.partialorder %v626, 0.0
    %v733 = vand.u32 %v626, 2147483648
    %v734 = vsel %vm732, %v733, %v731
    %v735 = vrsqrt.pop %v629
    %v736 = vmul.f32 %v629, %v735
    %vm737 = vcmp.eq.f32.partialorder %v629, inf
    %v738 = vsel %vm737, %v629, %v736
    %vm739 = vcmp.eq.f32.partialorder %v629, 0.0
    %v740 = vand.u32 %v629, 2147483648
    %v741 = vsel %vm739, %v740, %v738
    %v742 = vadd.f32 %v636, 1e-07
    %v743 = vadd.f32 %v643, 1e-07
    %v744 = vadd.f32 %v650, 1e-07
    %v745 = vadd.f32 %v657, 1e-07
    %v746 = vadd.f32 %v664, 1e-07
    %v747 = vadd.f32 %v671, 1e-07
    %v748 = vadd.f32 %v678, 1e-07
    %v749 = vadd.f32 %v685, 1e-07
    %v750 = vadd.f32 %v692, 1e-07
    %v751 = vadd.f32 %v699, 1e-07
    %v752 = vadd.f32 %v706, 1e-07
    %v753 = vadd.f32 %v713, 1e-07
    %v754 = vadd.f32 %v720, 1e-07
    %v755 = vadd.f32 %v727, 1e-07
    %v756 = vadd.f32 %v734, 1e-07
    %v757 = vadd.f32 %v741, 1e-07
    %v758 = vrcp.pop %v742
    %v759 = vrcp.pop %v743
    %v760 = vrcp.pop %v744
    %v761 = vrcp.pop %v745
    %v762 = vrcp.pop %v746
    %v763 = vrcp.pop %v747
    %v764 = vrcp.pop %v748
    %v765 = vrcp.pop %v749
    %v766 = vrcp.pop %v750
    %v767 = vrcp.pop %v751
    %v768 = vrcp.pop %v752
    %v769 = vrcp.pop %v753
    %v770 = vrcp.pop %v754
    %v771 = vrcp.pop %v755
    %v772 = vrcp.pop %v756
    %v773 = vrcp.pop %v757
    %v774 = vmul.f32 %v456, %v758
    %v775 = vmul.f32 %v458, %v758
    %v776 = vmul.f32 %v462, %v759
    %v777 = vmul.f32 %v464, %v759
    %v778 = vmul.f32 %v468, %v760
    %v779 = vmul.f32 %v470, %v760
    %v780 = vmul.f32 %v474, %v761
    %v781 = vmul.f32 %v476, %v761
    %v782 = vmul.f32 %v480, %v762
    %v783 = vmul.f32 %v482, %v762
    %v784 = vmul.f32 %v486, %v763
    %v785 = vmul.f32 %v488, %v763
    %v786 = vmul.f32 %v492, %v764
    %v787 = vmul.f32 %v494, %v764
    %v788 = vmul.f32 %v498, %v765
    %v789 = vmul.f32 %v500, %v765
    %v790 = vmul.f32 %v504, %v766
    %v791 = vmul.f32 %v506, %v766
    %v792 = vmul.f32 %v510, %v767
    %v793 = vmul.f32 %v512, %v767
    %v794 = vmul.f32 %v516, %v768
    %v795 = vmul.f32 %v518, %v768
    %v796 = vmul.f32 %v522, %v769
    %v797 = vmul.f32 %v524, %v769
    %v798 = vmul.f32 %v528, %v770
    %v799 = vmul.f32 %v530, %v770
    %v800 = vmul.f32 %v534, %v771
    %v801 = vmul.f32 %v536, %v771
    %v802 = vmul.f32 %v540, %v772
    %v803 = vmul.f32 %v542, %v772
    %v804 = vmul.f32 %v546, %v773
    %v805 = vmul.f32 %v548, %v773
    %806 = vst [vmem:[#allocation5] sm:$0xff] %v774
    %807 = vst [vmem:[#allocation5 + $0x8] sm:$0xff] %v775
    %808 = vst [vmem:[#allocation5 + $0x10] sm:$0xff] %v776
    %809 = vst [vmem:[#allocation5 + $0x18] sm:$0xff] %v777
    %810 = vst [vmem:[#allocation5 + $0x20] sm:$0xff] %v778
    %811 = vst [vmem:[#allocation5 + $0x28] sm:$0xff] %v779
    %812 = vst [vmem:[#allocation5 + $0x30] sm:$0xff] %v780
    %813 = vst [vmem:[#allocation5 + $0x38] sm:$0xff] %v781
    %814 = vst [vmem:[#allocation5 + $0x40] sm:$0xff] %v782
    %815 = vst [vmem:[#allocation5 + $0x48] sm:$0xff] %v783
    %816 = vst [vmem:[#allocation5 + $0x50] sm:$0xff] %v784
    %817 = vst [vmem:[#allocation5 + $0x58] sm:$0xff] %v785
    %818 = vst [vmem:[#allocation5 + $0x60] sm:$0xff] %v786
    %819 = vst [vmem:[#allocation5 + $0x68] sm:$0xff] %v787
    %820 = vst [vmem:[#allocation5 + $0x70] sm:$0xff] %v788
    %821 = vst [vmem:[#allocation5 + $0x78] sm:$0xff] %v789
    %822 = vst [vmem:[#allocation5 + $0x80] sm:$0xff] %v790
    %823 = vst [vmem:[#allocation5 + $0x88] sm:$0xff] %v791
    %824 = vst [vmem:[#allocation5 + $0x90] sm:$0xff] %v792
    %825 = vst [vmem:[#allocation5 + $0x98] sm:$0xff] %v793
    %826 = vst [vmem:[#allocation5 + $0xa0] sm:$0xff] %v794
    %827 = vst [vmem:[#allocation5 + $0xa8] sm:$0xff] %v795
    %828 = vst [vmem:[#allocation5 + $0xb0] sm:$0xff] %v796
    %829 = vst [vmem:[#allocation5 + $0xb8] sm:$0xff] %v797
    %830 = vst [vmem:[#allocation5 + $0xc0] sm:$0xff] %v798
    %831 = vst [vmem:[#allocation5 + $0xc8] sm:$0xff] %v799
    %832 = vst [vmem:[#allocation5 + $0xd0] sm:$0xff] %v800
    %833 = vst [vmem:[#allocation5 + $0xd8] sm:$0xff] %v801
    %834 = vst [vmem:[#allocation5 + $0xe0] sm:$0xff] %v802
    %835 = vst [vmem:[#allocation5 + $0xe8] sm:$0xff] %v803
    %836 = vst [vmem:[#allocation5 + $0xf0] sm:$0xff] %v804
    %837 = vst [vmem:[#allocation5 + $0xf8] sm:$0xff] %v805
    // Predicated region
    $region26: #{tpu_custom_call.1} parent=1 // pred_check
      _
    $region27: #{tpu_custom_call.1} parent=1 // pred_check_branch
      %839 = sbr.rel (0) target = $region29
    $region28: #{tpu_custom_call.1} parent=1 // pred_region
      %s841 = ssub.s32 4096, 4096
      %842 = vsyncadd [#allocation4], %s841
      %s843 = sshll.u32 [#allocation5], 4
      %s844 = int_to_ptr.vmem [resolvable:$true] %s843
      %849 = dma.vmem_to_hbm [thread:$0]  %s844, 4096, %s5, [#allocation4], 256, 256, 16
    $region29: #{tpu_custom_call.1} parent=1 // pred_fallthru
      _
    // Predicated region
    $region30: #{tpu_custom_call.1} parent=1 // pred_check
      _
    $region31: #{tpu_custom_call.1} parent=1 // pred_check_branch
      %851 = sbr.rel (0) target = $region33
    $region32: #{tpu_custom_call.1} parent=1 // pred_region
      %852 = dma.done [#allocation4], 4096
    $region33: #{tpu_custom_call.1} parent=1 // pred_fallthru
      _
    %853 = vsyncpa [#allocation3], 1
    %854 = vsyncpa [#allocation4], 1

</llo_original>
